<compile_context>
chip_gen: v6e
topology: v6e:2x2x1
jax: 0.10.0
libtpu: 0.0.40
codegen_flags: <defaults>
</compile_context>

<pallas_src>
import jax
import jax.numpy as jnp
from jax import lax
from jax.experimental import pallas as pl
from jax.experimental.pallas import tpu as pltpu

HIDDEN = 32
CHUNK = 512            # lanes per inner row; [32, CHUNK] f32 = 16 vregs
ROWS_PER_TILE = 32     # rows per grid step -> 16384 samples / step


def predict_model_kernel(x_ref, w1_ref, b1_ref, w2_ref, b2_ref,
                         w3_ref, b3_ref, we_ref, o_ref, z_sc):
    rows = x_ref.shape[0]

    # Weights stay resident; hoisted out of the row loop.
    w1 = w1_ref[...]                      # (32, 1)  f32
    b1 = b1_ref[...]                      # (32, 1)  f32
    w2 = w2_ref[...]                      # (32, 32) bf16
    b2 = b2_ref[...]                      # (32, 1)  f32
    w3 = w3_ref[...]                      # (32, 1)  f32

    def row_body(r, carry):
        x_row = x_ref[pl.ds(r, 1), :]                            # (1, C)
        # fc1 + relu: VPU outer product (K=1 contraction, no MXU).
        h1 = jnp.maximum(w1 * x_row + b1, 0.0)                   # (32, C) f32
        # fc2 + relu: MXU matmul, bf16 operands, f32 accumulation.
        h2 = jnp.dot(w2, h1.astype(jnp.bfloat16),
                     preferred_element_type=jnp.float32) + b2
        h2 = jnp.maximum(h2, 0.0)                                # (32, C) f32
        # fc3 (bias applied later): VPU scale + XLU sublane reduction.
        z = jnp.sum(h2 * w3, axis=0, keepdims=True)              # (1, C)
        z_sc[pl.ds(r, 1), :] = z
        return carry

    lax.fori_loop(0, rows, row_body, 0, unroll=True)

    # Sublane-dense tail on the whole tile: bias + sigmoid + est scale.
    o_ref[...] = jax.nn.sigmoid(z_sc[...] + b3_ref[0]) * we_ref[0]


def _cdiv(a, m):
    return -(-a // m)


def _round_up(a, m):
    return (a + m - 1) // m * m


def predict_model(x, params, chunk=CHUNK, rows_per_tile=ROWS_PER_TILE):
    """x: [N, 1] float32 -> [N, 1] float32. Params kept in PyTorch layouts."""
    w1, b1, w2, b2, w3, b3, we = params
    n = x.shape[0]

    n_rows = max(1, _cdiv(n, chunk))
    if n_rows <= rows_per_tile:
        r_tile = n_rows                       # single step; block == full array
    else:
        r_tile = _round_up(rows_per_tile, 8)  # keep sublane block dim legal
        n_rows = _round_up(n_rows, r_tile)
    n_pad = n_rows * chunk

    # Batch on lanes, row-major in sample index; padding lanes are zero.
    x2d = jnp.zeros((n_pad,), jnp.float32).at[:n].set(
        x[:, 0].astype(jnp.float32)).reshape(n_rows, chunk)

    # Kernel-layout params ("transposed network": h_next = W @ h + b).
    w1c = jnp.asarray(w1, jnp.float32).reshape(HIDDEN, 1)
    b1c = jnp.asarray(b1, jnp.float32).reshape(HIDDEN, 1)
    w2b = jnp.asarray(w2, jnp.float32).astype(jnp.bfloat16)      # (32, 32)
    b2c = jnp.asarray(b2, jnp.float32).reshape(HIDDEN, 1)
    w3c = jnp.asarray(w3, jnp.float32).reshape(1, HIDDEN).T      # (32, 1)
    b3s = jnp.asarray(b3, jnp.float32).reshape(1)
    wes = jnp.asarray(we, jnp.float32).reshape(1)

    grid = (n_rows // r_tile,)
    const = lambda i: (0, 0)   # weights resident, no per-step re-DMA

    out2d = pl.pallas_call(
        predict_model_kernel,
        out_shape=jax.ShapeDtypeStruct((n_rows, chunk), jnp.float32),
        grid=grid,
        in_specs=[
            pl.BlockSpec((r_tile, chunk), lambda i: (i, 0)),      # x tile
            pl.BlockSpec((HIDDEN, 1), const),                     # fc1.weight
            pl.BlockSpec((HIDDEN, 1), const),                     # fc1.bias (col)
            pl.BlockSpec((HIDDEN, HIDDEN), const),                # fc2.weight bf16
            pl.BlockSpec((HIDDEN, 1), const),                     # fc2.bias (col)
            pl.BlockSpec((HIDDEN, 1), const),                     # fc3.weight (col)
            pl.BlockSpec(memory_space=pltpu.MemorySpace.SMEM),    # fc3.bias
            pl.BlockSpec(memory_space=pltpu.MemorySpace.SMEM),    # est.weight
        ],
        out_specs=pl.BlockSpec((r_tile, chunk), lambda i: (i, 0)),
        scratch_shapes=[pltpu.VMEM((r_tile, chunk), jnp.float32)],
        compiler_params=pltpu.CompilerParams(
            # "parallel" lets the batch axis shard across TCs on multi-core
            # parts (v7x); near-neutral on single-TC v5e/v6e.
            dimension_semantics=("parallel",),
            vmem_limit_bytes=32 * 1024 * 1024,
        ),
    )(x2d, w1c, b1c, w2b, b2c, w3c, b3s, wes)

    return out2d.reshape(n_pad)[:n].reshape(n, 1)


def init_params(key):
    """Deterministic synthetic init matching nn.Linear shapes (PyTorch layout)."""
    k1, k2, k3, k4, k5, k6 = jax.random.split(key, 6)

    def uniform(k, shape, fan_in):
        bound = 1.0 / jnp.sqrt(jnp.float32(fan_in))
        return jax.random.uniform(k, shape, jnp.float32, -bound, bound)

    w1 = uniform(k1, (HIDDEN, 1), 1)            # fc1.weight [32, 1]
    b1 = uniform(k2, (HIDDEN,), 1)              # fc1.bias   [32]
    w2 = uniform(k3, (HIDDEN, HIDDEN), HIDDEN)  # fc2.weight [32, 32]
    b2 = uniform(k4, (HIDDEN,), HIDDEN)         # fc2.bias   [32]
    w3 = uniform(k5, (1, HIDDEN), HIDDEN)       # fc3.weight [1, 32]
    b3 = uniform(k6, (1,), HIDDEN)              # fc3.bias   [1]
    we = jnp.ones((1,), jnp.float32)            # est.weight (constant 1)
    return (w1, b1, w2, b2, w3, b3, we)


def reference(x, params):
    w1, b1, w2, b2, w3, b3, we = params
    h1 = jnp.maximum(x @ w1.T + b1, 0.0)
    h2 = jnp.maximum(h1 @ w2.T + b2, 0.0)
    s = jax.nn.sigmoid(h2 @ w3.T + b3)
    return s * we[0]


if __name__ == "__main__":
    key = jax.random.PRNGKey(0)
    kp, kx1, kx2, kx3 = jax.random.split(key, 4)
    params = init_params(kp)

    # bf16 MXU operands (f32 accumulation) -> loosened tolerance vs f32 ref.
    atol = rtol = 2e-2

    # Small batch: single row, single grid step.
    x1 = jax.random.normal(kx1, (8, 1), jnp.float32)
    out1 = jax.block_until_ready(predict_model(x1, params))
    ref1 = reference(x1, params)
    assert out1.shape == (8, 1)
    assert jnp.allclose(out1, ref1, atol=atol, rtol=rtol), (out1, ref1)

    # Partially filled single tile (exercises lane padding).
    x2 = jax.random.normal(kx2, (300, 1), jnp.float32)
    out2 = jax.block_until_ready(predict_model(x2, params))
    ref2 = reference(x2, params)
    assert out2.shape == (300, 1)
    assert jnp.allclose(out2, ref2, atol=atol, rtol=rtol)

    # Multi-tile grid (exercises grid steps, row padding, inner unrolled loop).
    x3 = jax.random.normal(kx3, (40000, 1), jnp.float32)
    out3 = jax.block_until_ready(predict_model(x3, params))
    ref3 = reference(x3, params)
    assert out3.shape == (40000, 1)
    assert jnp.allclose(out3, ref3, atol=atol, rtol=rtol)

    print("KERNEL_OK")
</pallas_src>

<mosaic_0001>
module attributes {stable_mosaic.version = 11 : i64} {
  func.func @predict_model_kernel(%arg0: i32, %arg1: memref<1x512xf32, #tpu.memory_space<vmem>>, %arg2: memref<32x1xf32, #tpu.memory_space<vmem>>, %arg3: memref<32x1xf32, #tpu.memory_space<vmem>>, %arg4: memref<32x32xbf16, #tpu.memory_space<vmem>>, %arg5: memref<32x1xf32, #tpu.memory_space<vmem>>, %arg6: memref<32x1xf32, #tpu.memory_space<vmem>>, %arg7: memref<1xf32, #tpu.memory_space<smem>>, %arg8: memref<1xf32, #tpu.memory_space<smem>>, %arg9: memref<1x512xf32, #tpu.memory_space<vmem>>, %arg10: memref<1x512xf32, #tpu.memory_space<vmem>>) attributes {dimension_semantics = [#tpu.dimension_semantics<parallel>], iteration_bounds = array<i64: 1>, scalar_prefetch = 0 : i64, scratch_operands = 1 : i64, tpu.core_type = #tpu.core_type<tc>, window_params = [{transform_indices = @transform_0, window_bounds = array<i64: 1, 512>}, {pipeline_mode = #tpu.pipeline_mode<synchronous>, transform_indices = @transform_1, window_bounds = array<i64: 32, 1>}, {pipeline_mode = #tpu.pipeline_mode<synchronous>, transform_indices = @transform_2, window_bounds = array<i64: 32, 1>}, {pipeline_mode = #tpu.pipeline_mode<synchronous>, transform_indices = @transform_3, window_bounds = array<i64: 32, 32>}, {pipeline_mode = #tpu.pipeline_mode<synchronous>, transform_indices = @transform_4, window_bounds = array<i64: 32, 1>}, {pipeline_mode = #tpu.pipeline_mode<synchronous>, transform_indices = @transform_5, window_bounds = array<i64: 32, 1>}, {transform_indices = @transform_6, window_bounds = array<i64: 1>}, {transform_indices = @transform_7, window_bounds = array<i64: 1>}, {transform_indices = @transform_8, window_bounds = array<i64: 1, 512>}]} {
    %c0 = arith.constant 0 : index
    %c0_0 = arith.constant 0 : index
    %0 = vector.load %arg2[%c0, %c0_0] : memref<32x1xf32, #tpu.memory_space<vmem>>, vector<32x1xf32>
    %c0_1 = arith.constant 0 : index
    %c0_2 = arith.constant 0 : index
    %1 = vector.load %arg3[%c0_1, %c0_2] : memref<32x1xf32, #tpu.memory_space<vmem>>, vector<32x1xf32>
    %c0_3 = arith.constant 0 : index
    %c0_4 = arith.constant 0 : index
    %2 = vector.load %arg4[%c0_3, %c0_4] : memref<32x32xbf16, #tpu.memory_space<vmem>>, vector<32x32xbf16>
    %c0_5 = arith.constant 0 : index
    %c0_6 = arith.constant 0 : index
    %3 = vector.load %arg5[%c0_5, %c0_6] : memref<32x1xf32, #tpu.memory_space<vmem>>, vector<32x1xf32>
    %c0_7 = arith.constant 0 : index
    %c0_8 = arith.constant 0 : index
    %4 = vector.load %arg6[%c0_7, %c0_8] : memref<32x1xf32, #tpu.memory_space<vmem>>, vector<32x1xf32>
    %c0_i32 = arith.constant 0 : i32
    %5 = arith.index_cast %c0_i32 : i32 to index
    %c0_9 = arith.constant 0 : index
    %6 = vector.load %arg1[%5, %c0_9] : memref<1x512xf32, #tpu.memory_space<vmem>>, vector<1x512xf32>
    %7 = vector.broadcast %0 : vector<32x1xf32> to vector<32x512xf32>
    %8 = vector.broadcast %6 : vector<1x512xf32> to vector<32x512xf32>
    %9 = arith.mulf %7, %8 : vector<32x512xf32>
    %10 = vector.broadcast %1 : vector<32x1xf32> to vector<32x512xf32>
    %11 = arith.addf %9, %10 : vector<32x512xf32>
    %cst = arith.constant 0.000000e+00 : f32
    %12 = vector.broadcast %cst : f32 to vector<32x512xf32>
    %13 = arith.maximumf %11, %12 : vector<32x512xf32>
    %14 = arith.truncf %13 : vector<32x512xf32> to vector<32x512xbf16>
    %cst_10 = arith.constant dense<0.000000e+00> : vector<32x512xf32>
    %15 = tpu.matmul %2, %14, %cst_10 {dimension_numbers = #tpu.dot_dimension_numbers<[1], [0], [0], [1], [0, 0, 1, 1], [], []>} : vector<32x32xbf16>, vector<32x512xbf16>, vector<32x512xf32> -> vector<32x512xf32>
    %16 = vector.broadcast %3 : vector<32x1xf32> to vector<32x512xf32>
    %17 = arith.addf %15, %16 : vector<32x512xf32>
    %cst_11 = arith.constant 0.000000e+00 : f32
    %18 = vector.broadcast %cst_11 : f32 to vector<32x512xf32>
    %19 = arith.maximumf %17, %18 : vector<32x512xf32>
    %20 = vector.broadcast %4 : vector<32x1xf32> to vector<32x512xf32>
    %21 = arith.mulf %19, %20 : vector<32x512xf32>
    %cst_12 = arith.constant dense<0.000000e+00> : vector<512xf32>
    %22 = vector.multi_reduction <add>, %21, %cst_12 [0] : vector<32x512xf32> to vector<512xf32>
    %23 = vector.shape_cast %22 : vector<512xf32> to vector<1x512xf32>
    %24 = arith.index_cast %c0_i32 : i32 to index
    %c0_13 = arith.constant 0 : index
    %25 = vector.load %arg10[%24, %c0_13] : memref<1x512xf32, #tpu.memory_space<vmem>>, vector<1x512xf32>
    tpu.vector_store %arg10[%24, %c0_13], %23 {strides = array<i32>} : memref<1x512xf32, #tpu.memory_space<vmem>>, vector<1x512xf32>,
    %c1_i32 = arith.constant 1 : i32
    %c0_14 = arith.constant 0 : index
    %c0_15 = arith.constant 0 : index
    %26 = vector.load %arg10[%c0_14, %c0_15] : memref<1x512xf32, #tpu.memory_space<vmem>>, vector<1x512xf32>
    %c0_16 = arith.constant 0 : index
    %27 = memref.load %arg7[%c0_16] : memref<1xf32, #tpu.memory_space<smem>>
    %28 = vector.broadcast %27 : f32 to vector<1x512xf32>
    %29 = arith.addf %26, %28 : vector<1x512xf32>
    %30 = arith.negf %29 : vector<1x512xf32>
    %31 = math.exp %30 : vector<1x512xf32>
    %cst_17 = arith.constant 1.000000e+00 : f32
    %32 = vector.broadcast %cst_17 : f32 to vector<1x512xf32>
    %33 = arith.addf %32, %31 : vector<1x512xf32>
    %34 = arith.divf %32, %33 : vector<1x512xf32>
    %c0_18 = arith.constant 0 : index
    %35 = memref.load %arg8[%c0_18] : memref<1xf32, #tpu.memory_space<smem>>
    %36 = vector.broadcast %35 : f32 to vector<1x512xf32>
    %37 = arith.mulf %34, %36 : vector<1x512xf32>
    %c0_19 = arith.constant 0 : index
    %c0_20 = arith.constant 0 : index
    %38 = vector.load %arg9[%c0_19, %c0_20] : memref<1x512xf32, #tpu.memory_space<vmem>>, vector<1x512xf32>
    tpu.vector_store %arg9[%c0_19, %c0_20], %37 {strides = array<i32>} : memref<1x512xf32, #tpu.memory_space<vmem>>, vector<1x512xf32>,
    return
  }
  func.func @transform_0(%arg0: i32) -> (i32, i32) {
    %c0_i32 = arith.constant 0 : i32
    %c0_i32_0 = arith.constant 0 : i32
    return %arg0, %c0_i32 : i32, i32
  }
  func.func @transform_1(%arg0: i32) -> (i32, i32) {
    %c0_i32 = arith.constant 0 : i32
    %c0_i32_0 = arith.constant 0 : i32
    %c0_i32_1 = arith.constant 0 : i32
    return %c0_i32, %c0_i32_0 : i32, i32
  }
  func.func @transform_2(%arg0: i32) -> (i32, i32) {
    %c0_i32 = arith.constant 0 : i32
    %c0_i32_0 = arith.constant 0 : i32
    %c0_i32_1 = arith.constant 0 : i32
    return %c0_i32, %c0_i32_0 : i32, i32
  }
  func.func @transform_3(%arg0: i32) -> (i32, i32) {
    %c0_i32 = arith.constant 0 : i32
    %c0_i32_0 = arith.constant 0 : i32
    %c0_i32_1 = arith.constant 0 : i32
    return %c0_i32, %c0_i32_0 : i32, i32
  }
  func.func @transform_4(%arg0: i32) -> (i32, i32) {
    %c0_i32 = arith.constant 0 : i32
    %c0_i32_0 = arith.constant 0 : i32
    %c0_i32_1 = arith.constant 0 : i32
    return %c0_i32, %c0_i32_0 : i32, i32
  }
  func.func @transform_5(%arg0: i32) -> (i32, i32) {
    %c0_i32 = arith.constant 0 : i32
    %c0_i32_0 = arith.constant 0 : i32
    %c0_i32_1 = arith.constant 0 : i32
    return %c0_i32, %c0_i32_0 : i32, i32
  }
  func.func @transform_6(%arg0: i32) -> i32 {
    %c0_i32 = arith.constant 0 : i32
    %c0_i32_0 = arith.constant 0 : i32
    return %c0_i32 : i32
  }
  func.func @transform_7(%arg0: i32) -> i32 {
    %c0_i32 = arith.constant 0 : i32
    %c0_i32_0 = arith.constant 0 : i32
    return %c0_i32 : i32
  }
  func.func @transform_8(%arg0: i32) -> (i32, i32) {
    %c0_i32 = arith.constant 0 : i32
    %c0_i32_0 = arith.constant 0 : i32
    return %arg0, %c0_i32 : i32, i32
  }
}

</mosaic_0001>

<llo_original>
// kernel: tpu_custom_call.1
$region0: #{tpu_custom_call.1}
  #allocation0 [shape = 'u32[]', space=smem, size = 0x4, offset = 0x4, fixed_abs, tag = 'smem constant byte address 0x4 - core index']
  #allocation1 [shape = 'u32[144,128]{1,0:T(1,128)}', space=vmem, size = 0x12000, scoped, tag = 'internal scratch']
  #allocation2 [shape = 'f32[1,512]{1,0:T(1,128)}', space=vmem, size = 0x800, scoped, tag = 'scratch operand']
  #allocation3 [shape = 'f32[1]{0:T(128)S(6)}', space=smem, size = 0x200, scoped, tag = 'scoped memory for tpu_custom_call.1']
  #allocation4 [shape = 'f32[1]{0:T(128)S(6)}', space=smem, size = 0x200, scoped, tag = 'scoped memory for tpu_custom_call.1']
  %s0 = inlined_call_operand.vmem [shape: f32[1,512], index: 0, kind: input, shape index: {}]
  %s1 = inlined_call_operand.vmem [shape: f32[32,1], index: 1, kind: input, shape index: {}]
  %s2 = inlined_call_operand.vmem [shape: f32[32,1], index: 2, kind: input, shape index: {}]
  %s3 = inlined_call_operand.vmem [shape: bf16[32,32], index: 3, kind: input, shape index: {}]
  %s4 = inlined_call_operand.vmem [shape: f32[32,1], index: 4, kind: input, shape index: {}]
  %s5 = inlined_call_operand.vmem [shape: f32[32,1], index: 5, kind: input, shape index: {}]
  %s6 = inlined_call_operand.<no memory space> [shape: f32[1], index: 6, kind: input, shape index: {}]
  %s7 = inlined_call_operand.<no memory space> [shape: f32[1], index: 7, kind: input, shape index: {}]
  %s8 = inlined_call_operand.hbm [shape: f32[1,512], index: 8, kind: output, shape index: {}]
  %s9 = sld [smem:[#allocation0]]
  $region42: #{tpu_custom_call.1} parent=0
    _
  %s11 = ssub.s32 1, %s9
  %s12 = scalar_select 0, %s11, %s9
  %13 = sst [smem:[#allocation3]] %s6
  %14 = sst [smem:[#allocation4]] %s7
  $region1: #{tpu_custom_call.1} parent=0
    #allocation5 [shape = 'u8[2048]{0}', space=vmem, size = 0x800, scoped, tag = 'output window, operand 0, single buffered']
    #allocation6 [shape = 's32[1]{0}', space=sflag, size = 0x4, scoped, tag = 'scoped memory for tpu_custom_call.1']
    %15 = vsyncpa [#allocation6], 0
    // Predicated region
    $region2: #{tpu_custom_call.1} parent=1 // pred_check
      _
    $region3: #{tpu_custom_call.1} parent=1 // pred_check_branch
      %17 = sbr.rel (0) target = $region5
    $region4: #{tpu_custom_call.1} parent=1 // pred_region
      _
    $region5: #{tpu_custom_call.1} parent=1 // pred_fallthru
      _
    // Predicated region
    $region6: #{tpu_custom_call.1} parent=1 // pred_check
      _
    $region7: #{tpu_custom_call.1} parent=1 // pred_check_branch
      %19 = sbr.rel (0) target = $region9
    $region8: #{tpu_custom_call.1} parent=1 // pred_region
      _
    $region9: #{tpu_custom_call.1} parent=1 // pred_fallthru
      _
    // Predicated region
    $region10: #{tpu_custom_call.1} parent=1 // pred_check
      _
    $region11: #{tpu_custom_call.1} parent=1 // pred_check_branch
      %21 = sbr.rel (0) target = $region13
    $region12: #{tpu_custom_call.1} parent=1 // pred_region
      _
    $region13: #{tpu_custom_call.1} parent=1 // pred_fallthru
      _
    // Predicated region
    $region14: #{tpu_custom_call.1} parent=1 // pred_check
      _
    $region15: #{tpu_custom_call.1} parent=1 // pred_check_branch
      %23 = sbr.rel (0) target = $region17
    $region16: #{tpu_custom_call.1} parent=1 // pred_region
      _
    $region17: #{tpu_custom_call.1} parent=1 // pred_fallthru
      _
    // Predicated region
    $region18: #{tpu_custom_call.1} parent=1 // pred_check
      _
    $region19: #{tpu_custom_call.1} parent=1 // pred_check_branch
      %25 = sbr.rel (0) target = $region21
    $region20: #{tpu_custom_call.1} parent=1 // pred_region
      _
    $region21: #{tpu_custom_call.1} parent=1 // pred_fallthru
      _
    // Predicated region
    $region22: #{tpu_custom_call.1} parent=1 // pred_check
      _
    $region23: #{tpu_custom_call.1} parent=1 // pred_check_branch
      %27 = sbr.rel (0) target = $region25
    $region24: #{tpu_custom_call.1} parent=1 // pred_region
      _
    $region25: #{tpu_custom_call.1} parent=1 // pred_fallthru
      _
    // Predicated region
    $region26: #{tpu_custom_call.1} parent=1 // pred_check
      _
    $region27: #{tpu_custom_call.1} parent=1 // pred_check_branch
      %29 = sbr.rel (0) target = $region29
    $region28: #{tpu_custom_call.1} parent=1 // pred_region
      _
    $region29: #{tpu_custom_call.1} parent=1 // pred_fallthru
      _
    // Predicated region
    $region30: #{tpu_custom_call.1} parent=1 // pred_check
      _
    $region31: #{tpu_custom_call.1} parent=1 // pred_check_branch
      %31 = sbr.rel (0) target = $region33
    $region32: #{tpu_custom_call.1} parent=1 // pred_region
      _
    $region33: #{tpu_custom_call.1} parent=1 // pred_fallthru
      _
    %v33 = vld [vmem:[%s1] sm:$0xff]
    %v34 = vld [vmem:[%s1 + $0x8] sm:$0xff]
    %v35 = vld [vmem:[%s1 + $0x10] sm:$0xff]
    %v36 = vld [vmem:[%s1 + $0x18] sm:$0xff]
    %v37 = vld [vmem:[%s2] sm:$0xff]
    %v38 = vld [vmem:[%s2 + $0x8] sm:$0xff]
    %v39 = vld [vmem:[%s2 + $0x10] sm:$0xff]
    %v40 = vld [vmem:[%s2 + $0x18] sm:$0xff]
    %v41 = vld [vmem:[%s3] sm:$0xf]
    %v42 = vld [vmem:[%s3 + $0x4] sm:$0xf]
    %v43 = vld [vmem:[%s3 + $0x8] sm:$0xf]
    %v44 = vld [vmem:[%s3 + $0xc] sm:$0xf]
    %v45 = vld [vmem:[%s4] sm:$0xff]
    %v46 = vld [vmem:[%s4 + $0x8] sm:$0xff]
    %v47 = vld [vmem:[%s4 + $0x10] sm:$0xff]
    %v48 = vld [vmem:[%s4 + $0x18] sm:$0xff]
    %v49 = vld [vmem:[%s5] sm:$0xff]
    %v50 = vld [vmem:[%s5 + $0x8] sm:$0xff]
    %v51 = vld [vmem:[%s5 + $0x10] sm:$0xff]
    %v52 = vld [vmem:[%s5 + $0x18] sm:$0xff]
    %v53 = vld [vmem:[%s0] sm:$0xf]
    %55 = vset.pattern.permute.xlu0 0
    %56 = vperm.xlu0 %55, %v33
    %v57 = vpop.permute.xlu0 %56
    %60 = vset.pattern.permute.xlu0 0
    %61 = vperm.xlu0 %60, %v34
    %v62 = vpop.permute.xlu0 %61
    %65 = vset.pattern.permute.xlu0 0
    %66 = vperm.xlu0 %65, %v35
    %v67 = vpop.permute.xlu0 %66
    %70 = vset.pattern.permute.xlu0 0
    %71 = vperm.xlu0 %70, %v36
    %v72 = vpop.permute.xlu0 %71
    %v75 = vlaneseq
    %v76 = vshrl.u32 %v75, 7
    %v77 = vsub.s32 0, %v76
    %v78 = vrot.slane %v53, %v77
    %v79 = vlaneseq
    %v80 = vshrl.u32 %v79, 7
    %v81 = vsub.s32 1, %v80
    %v82 = vrot.slane %v53, %v81
    %v83 = vlaneseq
    %v84 = vshrl.u32 %v83, 7
    %v85 = vsub.s32 2, %v84
    %v86 = vrot.slane %v53, %v85
    %v87 = vlaneseq
    %v88 = vshrl.u32 %v87, 7
    %v89 = vsub.s32 3, %v88
    %v90 = vrot.slane %v53, %v89
    %v95 = vmul.f32 %v57, %v78
    %v96 = vmul.f32 %v57, %v82
    %v97 = vmul.f32 %v57, %v86
    %v98 = vmul.f32 %v57, %v90
    %v99 = vmul.f32 %v62, %v78
    %v100 = vmul.f32 %v62, %v82
    %v101 = vmul.f32 %v62, %v86
    %v102 = vmul.f32 %v62, %v90
    %v103 = vmul.f32 %v67, %v78
    %v104 = vmul.f32 %v67, %v82
    %v105 = vmul.f32 %v67, %v86
    %v106 = vmul.f32 %v67, %v90
    %v107 = vmul.f32 %v72, %v78
    %v108 = vmul.f32 %v72, %v82
    %v109 = vmul.f32 %v72, %v86
    %v110 = vmul.f32 %v72, %v90
    %112 = vset.pattern.permute.xlu0 0
    %113 = vperm.xlu0 %112, %v37
    %v114 = vpop.permute.xlu0 %113
    %117 = vset.pattern.permute.xlu0 0
    %118 = vperm.xlu0 %117, %v38
    %v119 = vpop.permute.xlu0 %118
    %122 = vset.pattern.permute.xlu0 0
    %123 = vperm.xlu0 %122, %v39
    %v124 = vpop.permute.xlu0 %123
    %127 = vset.pattern.permute.xlu0 0
    %128 = vperm.xlu0 %127, %v40
    %v129 = vpop.permute.xlu0 %128
    %v131 = vadd.f32 %v95, %v114
    %v132 = vadd.f32 %v96, %v114
    %v133 = vadd.f32 %v97, %v114
    %v134 = vadd.f32 %v98, %v114
    %v135 = vadd.f32 %v99, %v119
    %v136 = vadd.f32 %v100, %v119
    %v137 = vadd.f32 %v101, %v119
    %v138 = vadd.f32 %v102, %v119
    %v139 = vadd.f32 %v103, %v124
    %v140 = vadd.f32 %v104, %v124
    %v141 = vadd.f32 %v105, %v124
    %v142 = vadd.f32 %v106, %v124
    %v143 = vadd.f32 %v107, %v129
    %v144 = vadd.f32 %v108, %v129
    %v145 = vadd.f32 %v109, %v129
    %v146 = vadd.f32 %v110, %v129
    %v147 = vmax.f32 %v131, 0.0
    %v148 = vmax.f32 %v132, 0.0
    %v149 = vmax.f32 %v133, 0.0
    %v150 = vmax.f32 %v134, 0.0
    %v151 = vmax.f32 %v135, 0.0
    %v152 = vmax.f32 %v136, 0.0
    %v153 = vmax.f32 %v137, 0.0
    %v154 = vmax.f32 %v138, 0.0
    %v155 = vmax.f32 %v139, 0.0
    %v156 = vmax.f32 %v140, 0.0
    %v157 = vmax.f32 %v141, 0.0
    %v158 = vmax.f32 %v142, 0.0
    %v159 = vmax.f32 %v143, 0.0
    %v160 = vmax.f32 %v144, 0.0
    %v161 = vmax.f32 %v145, 0.0
    %v162 = vmax.f32 %v146, 0.0
    %v163 = vpack.c.bf16 %v151, %v147
    %v164 = vpack.c.bf16 %v152, %v148
    %v165 = vpack.c.bf16 %v153, %v149
    %v166 = vpack.c.bf16 %v154, %v150
    %v167 = vpack.c.bf16 %v159, %v155
    %v168 = vpack.c.bf16 %v160, %v156
    %v169 = vpack.c.bf16 %v161, %v157
    %v170 = vpack.c.bf16 %v162, %v158
    %172 = vset.pattern.permute.xlu0 0
    %173 = vperm.xlu0 %172, %v45
    %v174 = vpop.permute.xlu0 %173
    %177 = vset.pattern.permute.xlu0 0
    %178 = vperm.xlu0 %177, %v46
    %v179 = vpop.permute.xlu0 %178
    %182 = vset.pattern.permute.xlu0 0
    %183 = vperm.xlu0 %182, %v47
    %v184 = vpop.permute.xlu0 %183
    %187 = vset.pattern.permute.xlu0 0
    %188 = vperm.xlu0 %187, %v48
    %v189 = vpop.permute.xlu0 %188
    %v195 = vunpack.c.l.b16 %v41
    %v196 = vunpack.c.l.b16 %v42
    %v197 = vunpack.c.l.b16 %v43
    %v198 = vunpack.c.l.b16 %v44
    %v199 = vpack.c.b16 %v196, %v195
    %v200 = vpack.c.b16 %v198, %v197
    %vm201 = vcmask 261120
    %v203 = vsel %vm201, %v199, 0
    %v206 = vsel %vm201, %v200, 0
    %208 = vmatprep.subr.bf16.mxu0 0
    %209 = vmatpush1.bf16.msra.mxu0 0
    %210 = vmatprep.subr.bf16.mxu0 0
    %211 = vmatpush1.bf16.msra.mxu0 0
    %212 = vmatprep.subr.bf16.mxu0 0
    %213 = vmatpush1.bf16.msra.mxu0 0
    %214 = vmatprep.subr.bf16.mxu0 0
    %215 = vmatpush1.bf16.msra.mxu0 0
    %216 = vmatprep.subr.bf16.mxu0 0
    %217 = vmatpush1.bf16.msra.mxu0 0
    %218 = vmatprep.subr.bf16.mxu0 0
    %219 = vmatpush1.bf16.msra.mxu0 0
    %220 = vmatprep.subr.bf16.mxu0 %v168
    %221 = vmatpush1.bf16.msra.mxu0 %v167
    %222 = vmatprep.subr.bf16.mxu0 %v164
    %223 = vmatpush1.bf16.msra.mxu0 %v163
    %224 = vmatprep.subr.bf16.mxu0 0
    %225 = vmatpush2.bf16.msra.mxu0 0
    %226 = vmatprep.subr.bf16.mxu0 0
    %227 = vmatpush2.bf16.msra.mxu0 0
    %228 = vmatprep.subr.bf16.mxu0 0
    %229 = vmatpush2.bf16.msra.mxu0 0
    %230 = vmatprep.subr.bf16.mxu0 0
    %231 = vmatpush2.bf16.msra.mxu0 0
    %232 = vmatprep.subr.bf16.mxu0 0
    %233 = vmatpush2.bf16.msra.mxu0 0
    %234 = vmatprep.subr.bf16.mxu0 0
    %235 = vmatpush2.bf16.msra.mxu0 0
    %236 = vmatprep.subr.bf16.mxu0 0
    %237 = vmatpush2.bf16.msra.mxu0 0
    %238 = vmatprep.subr.bf16.mxu0 0
    %239 = vmatpush2.bf16.msra.mxu0 0
    %240 = vmatprep.mubr.bf16.mxu0 0
    %241 = vmatmul.mubr.bf16.gmra.mxu0 %v203
    %v242 = vpop.f32.mrf.mxu0
    %v243 = vadd.f32 %v174, %v242
    %v244 = vpop.f32.mrf.mxu0
    %v245 = vadd.f32 %v174, %v244
    %v246 = vpop.f32.mrf.mxu0
    %v247 = vadd.f32 %v179, %v246
    %v248 = vpop.f32.mrf.mxu0
    %v249 = vadd.f32 %v179, %v248
    %250 = vmatprep.mubr.bf16.mxu0 0
    %251 = vmatmul.mubr.bf16.gmra.mxu0 %v206
    %v252 = vpop.f32.mrf.mxu0
    %v253 = vadd.f32 %v184, %v252
    %v254 = vpop.f32.mrf.mxu0
    %v255 = vadd.f32 %v184, %v254
    %v256 = vpop.f32.mrf.mxu0
    %v257 = vadd.f32 %v189, %v256
    %v258 = vpop.f32.mrf.mxu0
    %v259 = vadd.f32 %v189, %v258
    %260 = vdwg.mxu0
    %261 = vmatprep.subr.bf16.mxu0 0
    %262 = vmatpush1.bf16.msra.mxu0 0
    %263 = vmatprep.subr.bf16.mxu0 0
    %264 = vmatpush1.bf16.msra.mxu0 0
    %265 = vmatprep.subr.bf16.mxu0 0
    %266 = vmatpush1.bf16.msra.mxu0 0
    %267 = vmatprep.subr.bf16.mxu0 0
    %268 = vmatpush1.bf16.msra.mxu0 0
    %269 = vmatprep.subr.bf16.mxu0 0
    %270 = vmatpush1.bf16.msra.mxu0 0
    %271 = vmatprep.subr.bf16.mxu0 0
    %272 = vmatpush1.bf16.msra.mxu0 0
    %273 = vmatprep.subr.bf16.mxu0 %v170
    %274 = vmatpush1.bf16.msra.mxu0 %v169
    %275 = vmatprep.subr.bf16.mxu0 %v166
    %276 = vmatpush1.bf16.msra.mxu0 %v165
    %277 = vmatprep.subr.bf16.mxu0 0
    %278 = vmatpush2.bf16.msra.mxu0 0
    %279 = vmatprep.subr.bf16.mxu0 0
    %280 = vmatpush2.bf16.msra.mxu0 0
    %281 = vmatprep.subr.bf16.mxu0 0
    %282 = vmatpush2.bf16.msra.mxu0 0
    %283 = vmatprep.subr.bf16.mxu0 0
    %284 = vmatpush2.bf16.msra.mxu0 0
    %285 = vmatprep.subr.bf16.mxu0 0
    %286 = vmatpush2.bf16.msra.mxu0 0
    %287 = vmatprep.subr.bf16.mxu0 0
    %288 = vmatpush2.bf16.msra.mxu0 0
    %289 = vmatprep.subr.bf16.mxu0 0
    %290 = vmatpush2.bf16.msra.mxu0 0
    %291 = vmatprep.subr.bf16.mxu0 0
    %292 = vmatpush2.bf16.msra.mxu0 0
    %293 = vmatprep.mubr.bf16.mxu0 0
    %294 = vmatmul.mubr.bf16.gmra.mxu0 %v203
    %v295 = vpop.f32.mrf.mxu0
    %v296 = vadd.f32 %v174, %v295
    %v297 = vpop.f32.mrf.mxu0
    %v298 = vadd.f32 %v174, %v297
    %v299 = vpop.f32.mrf.mxu0
    %v300 = vadd.f32 %v179, %v299
    %v301 = vpop.f32.mrf.mxu0
    %v302 = vadd.f32 %v179, %v301
    %303 = vmatprep.mubr.bf16.mxu0 0
    %304 = vmatmul.mubr.bf16.gmra.mxu0 %v206
    %v305 = vpop.f32.mrf.mxu0
    %v306 = vadd.f32 %v184, %v305
    %v307 = vpop.f32.mrf.mxu0
    %v308 = vadd.f32 %v184, %v307
    %v309 = vpop.f32.mrf.mxu0
    %v310 = vadd.f32 %v189, %v309
    %v311 = vpop.f32.mrf.mxu0
    %v312 = vadd.f32 %v189, %v311
    %313 = vdwg.mxu0
    %v314 = vmax.f32 %v243, 0.0
    %v315 = vmax.f32 %v245, 0.0
    %v316 = vmax.f32 %v296, 0.0
    %v317 = vmax.f32 %v298, 0.0
    %v318 = vmax.f32 %v247, 0.0
    %v319 = vmax.f32 %v249, 0.0
    %v320 = vmax.f32 %v300, 0.0
    %v321 = vmax.f32 %v302, 0.0
    %v322 = vmax.f32 %v253, 0.0
    %v323 = vmax.f32 %v255, 0.0
    %v324 = vmax.f32 %v306, 0.0
    %v325 = vmax.f32 %v308, 0.0
    %v326 = vmax.f32 %v257, 0.0
    %v327 = vmax.f32 %v259, 0.0
    %v328 = vmax.f32 %v310, 0.0
    %v329 = vmax.f32 %v312, 0.0
    %331 = vset.pattern.permute.xlu0 0
    %332 = vperm.xlu0 %331, %v49
    %v333 = vpop.permute.xlu0 %332
    %336 = vset.pattern.permute.xlu0 0
    %337 = vperm.xlu0 %336, %v50
    %v338 = vpop.permute.xlu0 %337
    %341 = vset.pattern.permute.xlu0 0
    %342 = vperm.xlu0 %341, %v51
    %v343 = vpop.permute.xlu0 %342
    %346 = vset.pattern.permute.xlu0 0
    %347 = vperm.xlu0 %346, %v52
    %v348 = vpop.permute.xlu0 %347
    %v350 = vmul.f32 %v314, %v333
    %v351 = vmul.f32 %v315, %v333
    %v352 = vmul.f32 %v316, %v333
    %v353 = vmul.f32 %v317, %v333
    %v354 = vmul.f32 %v318, %v338
    %v355 = vmul.f32 %v319, %v338
    %v356 = vmul.f32 %v320, %v338
    %v357 = vmul.f32 %v321, %v338
    %v358 = vmul.f32 %v322, %v343
    %v359 = vmul.f32 %v323, %v343
    %v360 = vmul.f32 %v324, %v343
    %v361 = vmul.f32 %v325, %v343
    %v362 = vmul.f32 %v326, %v348
    %v363 = vmul.f32 %v327, %v348
    %v364 = vmul.f32 %v328, %v348
    %v365 = vmul.f32 %v329, %v348
    %v366 = vadd.f32 %v350, %v354
    %v367 = vadd.f32 %v366, %v358
    %v368 = vadd.f32 %v367, %v362
    %v369 = vrot.slane %v368, 4
    %v370 = vadd.f32 %v368, %v369
    %v371 = vrot.slane %v370, 2
    %v372 = vadd.f32 %v370, %v371
    %v373 = vrot.slane %v372, 1
    %v374 = vadd.f32 %v372, %v373
    %v375 = vadd.f32 %v351, %v355
    %v376 = vadd.f32 %v375, %v359
    %v377 = vadd.f32 %v376, %v363
    %v378 = vrot.slane %v377, 4
    %v379 = vadd.f32 %v377, %v378
    %v380 = vrot.slane %v379, 2
    %v381 = vadd.f32 %v379, %v380
    %v382 = vrot.slane %v381, 1
    %v383 = vadd.f32 %v381, %v382
    %v384 = vadd.f32 %v352, %v356
    %v385 = vadd.f32 %v384, %v360
    %v386 = vadd.f32 %v385, %v364
    %v387 = vrot.slane %v386, 4
    %v388 = vadd.f32 %v386, %v387
    %v389 = vrot.slane %v388, 2
    %v390 = vadd.f32 %v388, %v389
    %v391 = vrot.slane %v390, 1
    %v392 = vadd.f32 %v390, %v391
    %v393 = vadd.f32 %v353, %v357
    %v394 = vadd.f32 %v393, %v361
    %v395 = vadd.f32 %v394, %v365
    %v396 = vrot.slane %v395, 4
    %v397 = vadd.f32 %v395, %v396
    %v398 = vrot.slane %v397, 2
    %v399 = vadd.f32 %v397, %v398
    %v400 = vrot.slane %v399, 1
    %v401 = vadd.f32 %v399, %v400
    %v406 = vcombine.low %v374, %v383
    %v407 = vcombine.low %v392, %v401
    %v409 = vunpack.c.l.s4 1966171168
    %v410 = vunpack.c.0.s8 %v409
    %v411 = vlaneseq
    %v412 = vshrl.u32 %v411, 7
    %v413 = vsub.s32 %v410, %v412
    %v414 = vrot.slane %v406, %v413
    %v416 = vunpack.c.l.s4 1966171168
    %v417 = vunpack.c.0.s8 %v416
    %v418 = vlaneseq
    %v419 = vshrl.u32 %v418, 7
    %v420 = vsub.s32 %v417, %v419
    %v421 = vrot.slane %v407, %v420
    %v422 = vcombine.low %v414, %v421
    %v424 = vunpack.c.l.s4 1966171168
    %v425 = vunpack.c.0.s8 %v424
    %v426 = vlaneseq
    %v427 = vshrl.u32 %v426, 7
    %v428 = vsub.s32 %v425, %v427
    %v429 = vrot.slane %v422, %v428
    %v431 = vlaneseq
    %vm432 = vcmp.ge.s32.totalorder %v431, 0
    %vm433 = vcmp.lt.s32.totalorder %v431, 512
    %vm434 = vmand %vm432, %vm433
    %435 = vst.msk [vmem:[#allocation2] sm:$0xf] %vm434, %v429
    %v436 = vld [vmem:[#allocation2] sm:$0xf]
    %s437 = sld [smem:[#allocation3]]
    %v438 = vstv %s437
    %v439 = vadd.f32 %v436, %v438
    %v440 = vxor.u32 %v439, 2147483648
    %v441 = vmul.f32 %v440, 1.442695
    %v442 = vpow.pop %v441
    %v443 = vadd.f32 %v442, 1.0
    %v444 = vrcp.pop %v443
    %v445 = vmul.f32 1.0, %v444
    %s446 = sld [smem:[#allocation4]]
    %v447 = vstv %s446
    %v448 = vmul.f32 %v445, %v447
    %449 = vst.msk [vmem:[#allocation5] sm:$0xf] %vm434, %v448
    // Predicated region
    $region34: #{tpu_custom_call.1} parent=1 // pred_check
      _
    $region35: #{tpu_custom_call.1} parent=1 // pred_check_branch
      %451 = sbr.rel (0) target = $region37
    $region36: #{tpu_custom_call.1} parent=1 // pred_region
      %s453 = ssub.s32 64, 64
      %454 = vsyncadd [#allocation6], %s453
      %s456 = sshll.u32 [#allocation5], 4
      %s457 = int_to_ptr.vmem [resolvable:$true] %s456
      %459 = dma.vmem_to_hbm [thread:$0]  %s457, 64, %s8, [#allocation6]
    $region37: #{tpu_custom_call.1} parent=1 // pred_fallthru
      _
    // Predicated region
    $region38: #{tpu_custom_call.1} parent=1 // pred_check
      _
    $region39: #{tpu_custom_call.1} parent=1 // pred_check_branch
      %461 = sbr.rel (0) target = $region41
    $region40: #{tpu_custom_call.1} parent=1 // pred_region
      %462 = dma.done [#allocation6], 64
    $region41: #{tpu_custom_call.1} parent=1 // pred_fallthru
      _
    %463 = vsyncpa [#allocation6], 1

</llo_original>
